<compile_context>
chip_gen: v6e
topology: v6e:2x2x1
jax: 0.10.0
libtpu: 0.0.40
codegen_flags: <defaults>
</compile_context>

<pallas_src>
import functools

import jax
import jax.numpy as jnp
from jax import lax
from jax.experimental import pallas as pl
from jax.experimental.pallas import tpu as pltpu


def _round_up(x, m):
    return ((x + m - 1) // m) * m


def gru_fused_kernel(emb_ref, len_ref, w_ih_ref, b_fold_ref, w_hh_ref,
                     b_hhn_ref, w_out_ref, b_out_ref, out_ref, *, T, H):
    """Fused input projection + GRU recurrence + final Linear.

    Packed-gate lane layout (columns of w_ih / w_hh / gi / gh, P = 128):
        [0:H) -> z gate, [H:2H) -> r gate, [2H:3H) -> n gate, [3H:P) -> 0 pad.
    The hidden state lives in lanes [0:H) of a (BP, P) slab.

    emb_ref   : (T*BP, EP) f32   embedded tokens, seq-major, zero-padded
    len_ref   : (BP, P)   int32  lengths broadcast over lanes [0:H) of valid
                                 rows, zero elsewhere (lane-dense freeze mask)
    w_ih_ref  : (EP, P)   f32    packed / transposed input weights
    b_fold_ref: (1, P)    f32    b_ih (+ b_hh for z/r gates) packed
    w_hh_ref  : (P, P)    f32    packed / transposed recurrent weights
    b_hhn_ref : (1, P)    f32    recurrent bias of the n gate (lanes [2H:3H))
    w_out_ref : (P, OP)   f32    transposed Linear weight (zero-padded rows)
    b_out_ref : (1, OP)   f32
    out_ref   : (BP, OP)  f32    == self.out(h_n[-1])
    """
    TB, _ = emb_ref.shape
    P = w_hh_ref.shape[1]
    BP = TB // T

    # ---- one-shot work, off the serial critical path -----------------------
    # Non-recurrent projection for all T timesteps: a single MXU matmul.
    gi = jnp.dot(emb_ref[...], w_ih_ref[...],
                 preferred_element_type=jnp.float32) + b_fold_ref[...]

    # Weight-stationary recurrent matrix: one (P, P) load (16 vregs) hoisted
    # out of the recurrence instead of a per-step reload of a 3x wider tile.
    w_hh = w_hh_ref[...]
    b_hhn = jnp.broadcast_to(b_hhn_ref[...], (BP, P))   # hoisted broadcast
    len_mask = len_ref[...]                             # (BP, P) int32

    h = jnp.zeros((BP, P), jnp.float32)   # hidden state in lanes [0:H)

    # T is small and static: trace-time unroll == lax.fori_loop(unroll=True);
    # the scheduler sees every step and all slices / rolls are static.
    # TODO(synk): for large T switch to a time grid axis ("arbitrary", h in
    # VMEM scratch) so the emb/gi blocks stay bounded (v7x has 64 MiB VMEM).
    for t in range(T):
        gi_t = gi[t * BP:(t + 1) * BP]                  # sublane slice (free)
        # The only op on the serial critical path: one 128-wide MXU tile.
        gh = jnp.dot(h, w_hh, preferred_element_type=jnp.float32)
        s = jax.nn.sigmoid(gi_t + gh)                   # z @ [0:H), r @ [H:2H)
        r_n = pltpu.roll(s, shift=H, axis=1)            # r moved to [2H:3H)
        n = jnp.tanh(gi_t + r_n * (gh + b_hhn))         # n @ [2H:3H)
        n0 = pltpu.roll(n, shift=P - 2 * H, axis=1)     # n moved to [0:H)
        h_new = (1.0 - s) * n0 + s * h                  # valid in lanes [0:H)
        # pack_padded_sequence semantics: h freezes once t >= length[b]; the
        # mask is zero outside lanes [0:H) / valid rows, so padding stays 0.
        h = jnp.where(len_mask > t, h_new, h)

    # dropout (eval, dr=0) is identity; final Linear with lane-dense store.
    out_ref[...] = (jnp.dot(h, w_out_ref[...],
                            preferred_element_type=jnp.float32)
                    + b_out_ref[...])


def single_text_model_forward(params, input_seq, input_lengths):
    emb_table = params["embedding"]                   # (V, E)
    w_ih, w_hh = params["w_ih"], params["w_hh"]       # (3H, E), (3H, H)
    b_ih, b_hh = params["b_ih"], params["b_hh"]       # (3H,), (3H,)
    w_out, b_out = params["w_out"], params["b_out"]   # (O, H), (O,)

    B, T = input_seq.shape
    E = emb_table.shape[1]
    H = w_hh.shape[1]
    O = w_out.shape[0]

    # Padded sizes.  For large B grow BP toward the MXU height (128 / 256)
    # before ever adding a grid axis -- the recurrence cost is flat in BP.
    BP = _round_up(max(B, 8), 8)
    EP = _round_up(E, 128)
    P = _round_up(3 * H, 128)      # packed gates + hidden/contraction padding
    OP = _round_up(O, 128)

    # Embedding gather, seq-major (== input_seq.t()), padded to an aligned
    # slab so the projection is one MXU matmul inside the kernel.
    # TODO(synk): fuse the gather itself (scalar-prefetched token ids) to save
    # this HBM round trip at real vocab sizes.
    embedded = jnp.take(emb_table, input_seq.T, axis=0)            # (T, B, E)
    emb_pad = jnp.zeros((T, BP, EP), jnp.float32).at[:, :B, :E].set(embedded)
    emb2d = emb_pad.reshape(T * BP, EP)

    # Re-order PyTorch gate blocks (r, z, n) -> packed (z, r, n) and pad the
    # (small, one-time) weights directly -- no activation-sized scatters.
    def pack_zrn(a):
        return jnp.concatenate([a[H:2 * H], a[:H], a[2 * H:3 * H]], axis=0)

    b_fold = pack_zrn(
        b_ih + jnp.concatenate([b_hh[:2 * H], jnp.zeros((H,), jnp.float32)]))
    w_ih_pad = jnp.zeros((EP, P), jnp.float32).at[:E, :3 * H].set(
        pack_zrn(w_ih).T)
    w_hh_pad = jnp.zeros((P, P), jnp.float32).at[:H, :3 * H].set(
        pack_zrn(w_hh).T)
    # TODO(synk): a bf16 copy of w_hh_pad (f32 accumulate) would halve the
    # weight footprint on v6e/v7x; skipped to hold the 1e-4 f32 tolerance.
    b_fold_pad = jnp.zeros((1, P), jnp.float32).at[0, :3 * H].set(b_fold)
    b_hhn_pad = jnp.zeros((1, P), jnp.float32).at[0, 2 * H:3 * H].set(
        b_hh[2 * H:])
    w_out_pad = jnp.zeros((P, OP), jnp.float32).at[:H, :O].set(w_out.T)
    b_out_pad = jnp.zeros((1, OP), jnp.float32).at[0, :O].set(b_out)
    len_pad = jnp.zeros((BP, P), jnp.int32).at[:B, :H].set(
        input_lengths.astype(jnp.int32)[:, None])

    kernel = pl.pallas_call(
        functools.partial(gru_fused_kernel, T=T, H=H),
        out_shape=jax.ShapeDtypeStruct((BP, OP), jnp.float32),
        grid=(1,),
        in_specs=[
            pl.BlockSpec((T * BP, EP), lambda i: (0, 0)),
            pl.BlockSpec((BP, P), lambda i: (0, 0)),
            pl.BlockSpec((EP, P), lambda i: (0, 0)),
            pl.BlockSpec((1, P), lambda i: (0, 0)),
            pl.BlockSpec((P, P), lambda i: (0, 0)),
            pl.BlockSpec((1, P), lambda i: (0, 0)),
            pl.BlockSpec((P, OP), lambda i: (0, 0)),
            pl.BlockSpec((1, OP), lambda i: (0, 0)),
        ],
        out_specs=pl.BlockSpec((BP, OP), lambda i: (0, 0)),
        compiler_params=pltpu.CompilerParams(
            dimension_semantics=("arbitrary",)),
    )
    # TODO(synk): for B >> 8 on v7x add a leading batch grid axis marked
    # "parallel" (weights via constant index_map) so both TensorCores split
    # the batch; multi-layer / bidirectional GRU and the out_en=True padded
    # rnn_outputs path are not implemented in this single-direction kernel.
    out_pad = kernel(emb2d, len_pad, w_ih_pad, b_fold_pad, w_hh_pad,
                     b_hhn_pad, w_out_pad, b_out_pad)
    return out_pad[:B, :O]


def init_params(key, dic_size, embedding_dim, hidden_dim, output_dim):
    ks = jax.random.split(key, 6)
    emb = jax.random.normal(ks[0], (dic_size, embedding_dim), jnp.float32)
    # TODO(synk): PyTorch uses orthogonal init on GRU weights; deterministic
    # Gaussian init is used here since this is a synthetic instance.
    w_ih = 0.1 * jax.random.normal(ks[1], (3 * hidden_dim, embedding_dim),
                                   jnp.float32)
    w_hh = 0.1 * jax.random.normal(ks[2], (3 * hidden_dim, hidden_dim),
                                   jnp.float32)
    b_ih = jax.random.uniform(ks[3], (3 * hidden_dim,), jnp.float32, -0.1, 0.1)
    b_hh = jax.random.uniform(ks[4], (3 * hidden_dim,), jnp.float32, -0.1, 0.1)
    # matches torch.nn.init.uniform_(self.out.weight, -0.25, 0.25); bias = 0
    w_out = jax.random.uniform(ks[5], (output_dim, hidden_dim), jnp.float32,
                               -0.25, 0.25)
    b_out = jnp.zeros((output_dim,), jnp.float32)
    return {"embedding": emb, "w_ih": w_ih, "w_hh": w_hh,
            "b_ih": b_ih, "b_hh": b_hh, "w_out": w_out, "b_out": b_out}


def reference_forward(params, input_seq, input_lengths):
    """Pure-JAX reference matching the PyTorch forward semantics."""
    emb = jnp.take(params["embedding"], input_seq.T, axis=0)     # (T, B, E)
    B, T = input_seq.shape
    H = params["w_hh"].shape[1]
    w_ih_t = params["w_ih"].T                                    # (E, 3H)
    w_hh_t = params["w_hh"].T                                    # (H, 3H)
    b_ih, b_hh = params["b_ih"], params["b_hh"]
    lengths = input_lengths.astype(jnp.int32).reshape(B, 1)

    def step(h, xt_t):
        x_t, t = xt_t
        gi = x_t @ w_ih_t + b_ih
        gh = h @ w_hh_t + b_hh
        r = jax.nn.sigmoid(gi[:, :H] + gh[:, :H])
        z = jax.nn.sigmoid(gi[:, H:2 * H] + gh[:, H:2 * H])
        n = jnp.tanh(gi[:, 2 * H:] + r * gh[:, 2 * H:])
        h_new = (1.0 - z) * n + z * h
        return jnp.where(lengths > t, h_new, h), None

    h0 = jnp.zeros((B, H), jnp.float32)
    h_last, _ = lax.scan(step, h0, (emb, jnp.arange(T)))
    return h_last @ params["w_out"].T + params["b_out"]


if __name__ == "__main__":
    # small shapes consistent with the module
    dic_size, embedding_dim, hidden_dim, output_dim = 50, 32, 32, 8
    B, T = 4, 8

    key = jax.random.PRNGKey(0)
    k_par, k_seq = jax.random.split(key)
    params = init_params(k_par, dic_size, embedding_dim, hidden_dim,
                         output_dim)

    input_seq = jax.random.randint(k_seq, (B, T), 0, dic_size, dtype=jnp.int32)
    input_lengths = jnp.array([8, 5, 3, 1], dtype=jnp.int32)

    fwd = jax.jit(single_text_model_forward)
    out = jax.block_until_ready(fwd(params, input_seq, input_lengths))

    ref = reference_forward(params, input_seq, input_lengths)
    assert out.shape == (B, output_dim)
    max_err = jnp.max(jnp.abs(out - ref))
    assert jnp.allclose(out, ref, atol=1e-4, rtol=1e-4), (
        f"mismatch: max abs err {max_err}")

    print("KERNEL_OK")
</pallas_src>

<mosaic_0001>
module attributes {stable_mosaic.version = 11 : i64} {
  func.func @gru_fused_kernel(%arg0: i32, %arg1: memref<64x128xf32, #tpu.memory_space<vmem>>, %arg2: memref<8x128xi32, #tpu.memory_space<vmem>>, %arg3: memref<128x128xf32, #tpu.memory_space<vmem>>, %arg4: memref<1x128xf32, #tpu.memory_space<vmem>>, %arg5: memref<128x128xf32, #tpu.memory_space<vmem>>, %arg6: memref<1x128xf32, #tpu.memory_space<vmem>>, %arg7: memref<128x128xf32, #tpu.memory_space<vmem>>, %arg8: memref<1x128xf32, #tpu.memory_space<vmem>>, %arg9: memref<8x128xf32, #tpu.memory_space<vmem>>) attributes {dimension_semantics = [#tpu.dimension_semantics<arbitrary>], iteration_bounds = array<i64: 1>, scalar_prefetch = 0 : i64, scratch_operands = 0 : i64, tpu.core_type = #tpu.core_type<tc>, window_params = [{pipeline_mode = #tpu.pipeline_mode<synchronous>, transform_indices = @transform_0, window_bounds = array<i64: 64, 128>}, {pipeline_mode = #tpu.pipeline_mode<synchronous>, transform_indices = @transform_1, window_bounds = array<i64: 8, 128>}, {pipeline_mode = #tpu.pipeline_mode<synchronous>, transform_indices = @transform_2, window_bounds = array<i64: 128, 128>}, {pipeline_mode = #tpu.pipeline_mode<synchronous>, transform_indices = @transform_3, window_bounds = array<i64: 1, 128>}, {pipeline_mode = #tpu.pipeline_mode<synchronous>, transform_indices = @transform_4, window_bounds = array<i64: 128, 128>}, {pipeline_mode = #tpu.pipeline_mode<synchronous>, transform_indices = @transform_5, window_bounds = array<i64: 1, 128>}, {pipeline_mode = #tpu.pipeline_mode<synchronous>, transform_indices = @transform_6, window_bounds = array<i64: 128, 128>}, {pipeline_mode = #tpu.pipeline_mode<synchronous>, transform_indices = @transform_7, window_bounds = array<i64: 1, 128>}, {pipeline_mode = #tpu.pipeline_mode<synchronous>, transform_indices = @transform_8, window_bounds = array<i64: 8, 128>}]} {
    %c0 = arith.constant 0 : index
    %c0_0 = arith.constant 0 : index
    %0 = vector.load %arg1[%c0, %c0_0] : memref<64x128xf32, #tpu.memory_space<vmem>>, vector<64x128xf32>
    %c0_1 = arith.constant 0 : index
    %c0_2 = arith.constant 0 : index
    %1 = vector.load %arg3[%c0_1, %c0_2] : memref<128x128xf32, #tpu.memory_space<vmem>>, vector<128x128xf32>
    %cst = arith.constant dense<0.000000e+00> : vector<64x128xf32>
    %2 = tpu.matmul %0, %1, %cst {dimension_numbers = #tpu.dot_dimension_numbers<[1], [0], [0], [1], [0, 0, 1, 1], [], []>} : vector<64x128xf32>, vector<128x128xf32>, vector<64x128xf32> -> vector<64x128xf32>
    %c0_3 = arith.constant 0 : index
    %c0_4 = arith.constant 0 : index
    %3 = vector.load %arg4[%c0_3, %c0_4] : memref<1x128xf32, #tpu.memory_space<vmem>>, vector<1x128xf32>
    %4 = vector.broadcast %3 : vector<1x128xf32> to vector<64x128xf32>
    %5 = arith.addf %2, %4 : vector<64x128xf32>
    %c0_5 = arith.constant 0 : index
    %c0_6 = arith.constant 0 : index
    %6 = vector.load %arg5[%c0_5, %c0_6] : memref<128x128xf32, #tpu.memory_space<vmem>>, vector<128x128xf32>
    %c0_7 = arith.constant 0 : index
    %c0_8 = arith.constant 0 : index
    %7 = vector.load %arg6[%c0_7, %c0_8] : memref<1x128xf32, #tpu.memory_space<vmem>>, vector<1x128xf32>
    %8 = vector.shape_cast %7 : vector<1x128xf32> to vector<1x128xf32>
    %9 = vector.broadcast %8 : vector<1x128xf32> to vector<8x128xf32>
    %c0_9 = arith.constant 0 : index
    %c0_10 = arith.constant 0 : index
    %10 = vector.load %arg2[%c0_9, %c0_10] : memref<8x128xi32, #tpu.memory_space<vmem>>, vector<8x128xi32>
    %cst_11 = arith.constant 0.000000e+00 : f32
    %11 = vector.broadcast %cst_11 : f32 to vector<8x128xf32>
    %12 = vector.extract_strided_slice %5 {offsets = [0, 0], sizes = [8, 128], strides = [1, 1]} : vector<64x128xf32> to vector<8x128xf32>
    %cst_12 = arith.constant dense<0.000000e+00> : vector<8x128xf32>
    %13 = tpu.matmul %11, %6, %cst_12 {dimension_numbers = #tpu.dot_dimension_numbers<[1], [0], [0], [1], [0, 0, 1, 1], [], []>} : vector<8x128xf32>, vector<128x128xf32>, vector<8x128xf32> -> vector<8x128xf32>
    %14 = arith.addf %12, %13 : vector<8x128xf32>
    %15 = arith.negf %14 : vector<8x128xf32>
    %16 = math.exp %15 : vector<8x128xf32>
    %cst_13 = arith.constant 1.000000e+00 : f32
    %17 = vector.broadcast %cst_13 : f32 to vector<8x128xf32>
    %18 = arith.addf %17, %16 : vector<8x128xf32>
    %19 = arith.divf %17, %18 : vector<8x128xf32>
    %c32_i32 = arith.constant 32 : i32
    %20 = tpu.dynamic_rotate %19 by %c32_i32 dim 1 : vector<8x128xf32>, i32 -> vector<8x128xf32>
    %21 = arith.addf %13, %9 : vector<8x128xf32>
    %22 = arith.mulf %20, %21 : vector<8x128xf32>
    %23 = arith.addf %12, %22 : vector<8x128xf32>
    %24 = math.tanh %23 : vector<8x128xf32>
    %c64_i32 = arith.constant 64 : i32
    %25 = tpu.dynamic_rotate %24 by %c64_i32 dim 1 : vector<8x128xf32>, i32 -> vector<8x128xf32>
    %cst_14 = arith.constant 1.000000e+00 : f32
    %26 = vector.broadcast %cst_14 : f32 to vector<8x128xf32>
    %27 = arith.subf %26, %19 : vector<8x128xf32>
    %28 = arith.mulf %27, %25 : vector<8x128xf32>
    %29 = arith.mulf %19, %11 : vector<8x128xf32>
    %30 = arith.addf %28, %29 : vector<8x128xf32>
    %c0_i32 = arith.constant 0 : i32
    %31 = vector.broadcast %c0_i32 : i32 to vector<8x128xi32>
    %32 = arith.cmpi sgt, %10, %31 : vector<8x128xi32>
    %33 = arith.select %32, %30, %11 : vector<8x128xi1>, vector<8x128xf32>
    %34 = vector.extract_strided_slice %5 {offsets = [8, 0], sizes = [8, 128], strides = [1, 1]} : vector<64x128xf32> to vector<8x128xf32>
    %cst_15 = arith.constant dense<0.000000e+00> : vector<8x128xf32>
    %35 = tpu.matmul %33, %6, %cst_15 {dimension_numbers = #tpu.dot_dimension_numbers<[1], [0], [0], [1], [0, 0, 1, 1], [], []>} : vector<8x128xf32>, vector<128x128xf32>, vector<8x128xf32> -> vector<8x128xf32>
    %36 = arith.addf %34, %35 : vector<8x128xf32>
    %37 = arith.negf %36 : vector<8x128xf32>
    %38 = math.exp %37 : vector<8x128xf32>
    %cst_16 = arith.constant 1.000000e+00 : f32
    %39 = vector.broadcast %cst_16 : f32 to vector<8x128xf32>
    %40 = arith.addf %39, %38 : vector<8x128xf32>
    %41 = arith.divf %39, %40 : vector<8x128xf32>
    %c32_i32_17 = arith.constant 32 : i32
    %42 = tpu.dynamic_rotate %41 by %c32_i32_17 dim 1 : vector<8x128xf32>, i32 -> vector<8x128xf32>
    %43 = arith.addf %35, %9 : vector<8x128xf32>
    %44 = arith.mulf %42, %43 : vector<8x128xf32>
    %45 = arith.addf %34, %44 : vector<8x128xf32>
    %46 = math.tanh %45 : vector<8x128xf32>
    %c64_i32_18 = arith.constant 64 : i32
    %47 = tpu.dynamic_rotate %46 by %c64_i32_18 dim 1 : vector<8x128xf32>, i32 -> vector<8x128xf32>
    %cst_19 = arith.constant 1.000000e+00 : f32
    %48 = vector.broadcast %cst_19 : f32 to vector<8x128xf32>
    %49 = arith.subf %48, %41 : vector<8x128xf32>
    %50 = arith.mulf %49, %47 : vector<8x128xf32>
    %51 = arith.mulf %41, %33 : vector<8x128xf32>
    %52 = arith.addf %50, %51 : vector<8x128xf32>
    %c1_i32 = arith.constant 1 : i32
    %53 = vector.broadcast %c1_i32 : i32 to vector<8x128xi32>
    %54 = arith.cmpi sgt, %10, %53 : vector<8x128xi32>
    %55 = arith.select %54, %52, %33 : vector<8x128xi1>, vector<8x128xf32>
    %56 = vector.extract_strided_slice %5 {offsets = [16, 0], sizes = [8, 128], strides = [1, 1]} : vector<64x128xf32> to vector<8x128xf32>
    %cst_20 = arith.constant dense<0.000000e+00> : vector<8x128xf32>
    %57 = tpu.matmul %55, %6, %cst_20 {dimension_numbers = #tpu.dot_dimension_numbers<[1], [0], [0], [1], [0, 0, 1, 1], [], []>} : vector<8x128xf32>, vector<128x128xf32>, vector<8x128xf32> -> vector<8x128xf32>
    %58 = arith.addf %56, %57 : vector<8x128xf32>
    %59 = arith.negf %58 : vector<8x128xf32>
    %60 = math.exp %59 : vector<8x128xf32>
    %cst_21 = arith.constant 1.000000e+00 : f32
    %61 = vector.broadcast %cst_21 : f32 to vector<8x128xf32>
    %62 = arith.addf %61, %60 : vector<8x128xf32>
    %63 = arith.divf %61, %62 : vector<8x128xf32>
    %c32_i32_22 = arith.constant 32 : i32
    %64 = tpu.dynamic_rotate %63 by %c32_i32_22 dim 1 : vector<8x128xf32>, i32 -> vector<8x128xf32>
    %65 = arith.addf %57, %9 : vector<8x128xf32>
    %66 = arith.mulf %64, %65 : vector<8x128xf32>
    %67 = arith.addf %56, %66 : vector<8x128xf32>
    %68 = math.tanh %67 : vector<8x128xf32>
    %c64_i32_23 = arith.constant 64 : i32
    %69 = tpu.dynamic_rotate %68 by %c64_i32_23 dim 1 : vector<8x128xf32>, i32 -> vector<8x128xf32>
    %cst_24 = arith.constant 1.000000e+00 : f32
    %70 = vector.broadcast %cst_24 : f32 to vector<8x128xf32>
    %71 = arith.subf %70, %63 : vector<8x128xf32>
    %72 = arith.mulf %71, %69 : vector<8x128xf32>
    %73 = arith.mulf %63, %55 : vector<8x128xf32>
    %74 = arith.addf %72, %73 : vector<8x128xf32>
    %c2_i32 = arith.constant 2 : i32
    %75 = vector.broadcast %c2_i32 : i32 to vector<8x128xi32>
    %76 = arith.cmpi sgt, %10, %75 : vector<8x128xi32>
    %77 = arith.select %76, %74, %55 : vector<8x128xi1>, vector<8x128xf32>
    %78 = vector.extract_strided_slice %5 {offsets = [24, 0], sizes = [8, 128], strides = [1, 1]} : vector<64x128xf32> to vector<8x128xf32>
    %cst_25 = arith.constant dense<0.000000e+00> : vector<8x128xf32>
    %79 = tpu.matmul %77, %6, %cst_25 {dimension_numbers = #tpu.dot_dimension_numbers<[1], [0], [0], [1], [0, 0, 1, 1], [], []>} : vector<8x128xf32>, vector<128x128xf32>, vector<8x128xf32> -> vector<8x128xf32>
    %80 = arith.addf %78, %79 : vector<8x128xf32>
    %81 = arith.negf %80 : vector<8x128xf32>
    %82 = math.exp %81 : vector<8x128xf32>
    %cst_26 = arith.constant 1.000000e+00 : f32
    %83 = vector.broadcast %cst_26 : f32 to vector<8x128xf32>
    %84 = arith.addf %83, %82 : vector<8x128xf32>
    %85 = arith.divf %83, %84 : vector<8x128xf32>
    %c32_i32_27 = arith.constant 32 : i32
    %86 = tpu.dynamic_rotate %85 by %c32_i32_27 dim 1 : vector<8x128xf32>, i32 -> vector<8x128xf32>
    %87 = arith.addf %79, %9 : vector<8x128xf32>
    %88 = arith.mulf %86, %87 : vector<8x128xf32>
    %89 = arith.addf %78, %88 : vector<8x128xf32>
    %90 = math.tanh %89 : vector<8x128xf32>
    %c64_i32_28 = arith.constant 64 : i32
    %91 = tpu.dynamic_rotate %90 by %c64_i32_28 dim 1 : vector<8x128xf32>, i32 -> vector<8x128xf32>
    %cst_29 = arith.constant 1.000000e+00 : f32
    %92 = vector.broadcast %cst_29 : f32 to vector<8x128xf32>
    %93 = arith.subf %92, %85 : vector<8x128xf32>
    %94 = arith.mulf %93, %91 : vector<8x128xf32>
    %95 = arith.mulf %85, %77 : vector<8x128xf32>
    %96 = arith.addf %94, %95 : vector<8x128xf32>
    %c3_i32 = arith.constant 3 : i32
    %97 = vector.broadcast %c3_i32 : i32 to vector<8x128xi32>
    %98 = arith.cmpi sgt, %10, %97 : vector<8x128xi32>
    %99 = arith.select %98, %96, %77 : vector<8x128xi1>, vector<8x128xf32>
    %100 = vector.extract_strided_slice %5 {offsets = [32, 0], sizes = [8, 128], strides = [1, 1]} : vector<64x128xf32> to vector<8x128xf32>
    %cst_30 = arith.constant dense<0.000000e+00> : vector<8x128xf32>
    %101 = tpu.matmul %99, %6, %cst_30 {dimension_numbers = #tpu.dot_dimension_numbers<[1], [0], [0], [1], [0, 0, 1, 1], [], []>} : vector<8x128xf32>, vector<128x128xf32>, vector<8x128xf32> -> vector<8x128xf32>
    %102 = arith.addf %100, %101 : vector<8x128xf32>
    %103 = arith.negf %102 : vector<8x128xf32>
    %104 = math.exp %103 : vector<8x128xf32>
    %cst_31 = arith.constant 1.000000e+00 : f32
    %105 = vector.broadcast %cst_31 : f32 to vector<8x128xf32>
    %106 = arith.addf %105, %104 : vector<8x128xf32>
    %107 = arith.divf %105, %106 : vector<8x128xf32>
    %c32_i32_32 = arith.constant 32 : i32
    %108 = tpu.dynamic_rotate %107 by %c32_i32_32 dim 1 : vector<8x128xf32>, i32 -> vector<8x128xf32>
    %109 = arith.addf %101, %9 : vector<8x128xf32>
    %110 = arith.mulf %108, %109 : vector<8x128xf32>
    %111 = arith.addf %100, %110 : vector<8x128xf32>
    %112 = math.tanh %111 : vector<8x128xf32>
    %c64_i32_33 = arith.constant 64 : i32
    %113 = tpu.dynamic_rotate %112 by %c64_i32_33 dim 1 : vector<8x128xf32>, i32 -> vector<8x128xf32>
    %cst_34 = arith.constant 1.000000e+00 : f32
    %114 = vector.broadcast %cst_34 : f32 to vector<8x128xf32>
    %115 = arith.subf %114, %107 : vector<8x128xf32>
    %116 = arith.mulf %115, %113 : vector<8x128xf32>
    %117 = arith.mulf %107, %99 : vector<8x128xf32>
    %118 = arith.addf %116, %117 : vector<8x128xf32>
    %c4_i32 = arith.constant 4 : i32
    %119 = vector.broadcast %c4_i32 : i32 to vector<8x128xi32>
    %120 = arith.cmpi sgt, %10, %119 : vector<8x128xi32>
    %121 = arith.select %120, %118, %99 : vector<8x128xi1>, vector<8x128xf32>
    %122 = vector.extract_strided_slice %5 {offsets = [40, 0], sizes = [8, 128], strides = [1, 1]} : vector<64x128xf32> to vector<8x128xf32>
    %cst_35 = arith.constant dense<0.000000e+00> : vector<8x128xf32>
    %123 = tpu.matmul %121, %6, %cst_35 {dimension_numbers = #tpu.dot_dimension_numbers<[1], [0], [0], [1], [0, 0, 1, 1], [], []>} : vector<8x128xf32>, vector<128x128xf32>, vector<8x128xf32> -> vector<8x128xf32>
    %124 = arith.addf %122, %123 : vector<8x128xf32>
    %125 = arith.negf %124 : vector<8x128xf32>
    %126 = math.exp %125 : vector<8x128xf32>
    %cst_36 = arith.constant 1.000000e+00 : f32
    %127 = vector.broadcast %cst_36 : f32 to vector<8x128xf32>
    %128 = arith.addf %127, %126 : vector<8x128xf32>
    %129 = arith.divf %127, %128 : vector<8x128xf32>
    %c32_i32_37 = arith.constant 32 : i32
    %130 = tpu.dynamic_rotate %129 by %c32_i32_37 dim 1 : vector<8x128xf32>, i32 -> vector<8x128xf32>
    %131 = arith.addf %123, %9 : vector<8x128xf32>
    %132 = arith.mulf %130, %131 : vector<8x128xf32>
    %133 = arith.addf %122, %132 : vector<8x128xf32>
    %134 = math.tanh %133 : vector<8x128xf32>
    %c64_i32_38 = arith.constant 64 : i32
    %135 = tpu.dynamic_rotate %134 by %c64_i32_38 dim 1 : vector<8x128xf32>, i32 -> vector<8x128xf32>
    %cst_39 = arith.constant 1.000000e+00 : f32
    %136 = vector.broadcast %cst_39 : f32 to vector<8x128xf32>
    %137 = arith.subf %136, %129 : vector<8x128xf32>
    %138 = arith.mulf %137, %135 : vector<8x128xf32>
    %139 = arith.mulf %129, %121 : vector<8x128xf32>
    %140 = arith.addf %138, %139 : vector<8x128xf32>
    %c5_i32 = arith.constant 5 : i32
    %141 = vector.broadcast %c5_i32 : i32 to vector<8x128xi32>
    %142 = arith.cmpi sgt, %10, %141 : vector<8x128xi32>
    %143 = arith.select %142, %140, %121 : vector<8x128xi1>, vector<8x128xf32>
    %144 = vector.extract_strided_slice %5 {offsets = [48, 0], sizes = [8, 128], strides = [1, 1]} : vector<64x128xf32> to vector<8x128xf32>
    %cst_40 = arith.constant dense<0.000000e+00> : vector<8x128xf32>
    %145 = tpu.matmul %143, %6, %cst_40 {dimension_numbers = #tpu.dot_dimension_numbers<[1], [0], [0], [1], [0, 0, 1, 1], [], []>} : vector<8x128xf32>, vector<128x128xf32>, vector<8x128xf32> -> vector<8x128xf32>
    %146 = arith.addf %144, %145 : vector<8x128xf32>
    %147 = arith.negf %146 : vector<8x128xf32>
    %148 = math.exp %147 : vector<8x128xf32>
    %cst_41 = arith.constant 1.000000e+00 : f32
    %149 = vector.broadcast %cst_41 : f32 to vector<8x128xf32>
    %150 = arith.addf %149, %148 : vector<8x128xf32>
    %151 = arith.divf %149, %150 : vector<8x128xf32>
    %c32_i32_42 = arith.constant 32 : i32
    %152 = tpu.dynamic_rotate %151 by %c32_i32_42 dim 1 : vector<8x128xf32>, i32 -> vector<8x128xf32>
    %153 = arith.addf %145, %9 : vector<8x128xf32>
    %154 = arith.mulf %152, %153 : vector<8x128xf32>
    %155 = arith.addf %144, %154 : vector<8x128xf32>
    %156 = math.tanh %155 : vector<8x128xf32>
    %c64_i32_43 = arith.constant 64 : i32
    %157 = tpu.dynamic_rotate %156 by %c64_i32_43 dim 1 : vector<8x128xf32>, i32 -> vector<8x128xf32>
    %cst_44 = arith.constant 1.000000e+00 : f32
    %158 = vector.broadcast %cst_44 : f32 to vector<8x128xf32>
    %159 = arith.subf %158, %151 : vector<8x128xf32>
    %160 = arith.mulf %159, %157 : vector<8x128xf32>
    %161 = arith.mulf %151, %143 : vector<8x128xf32>
    %162 = arith.addf %160, %161 : vector<8x128xf32>
    %c6_i32 = arith.constant 6 : i32
    %163 = vector.broadcast %c6_i32 : i32 to vector<8x128xi32>
    %164 = arith.cmpi sgt, %10, %163 : vector<8x128xi32>
    %165 = arith.select %164, %162, %143 : vector<8x128xi1>, vector<8x128xf32>
    %166 = vector.extract_strided_slice %5 {offsets = [56, 0], sizes = [8, 128], strides = [1, 1]} : vector<64x128xf32> to vector<8x128xf32>
    %cst_45 = arith.constant dense<0.000000e+00> : vector<8x128xf32>
    %167 = tpu.matmul %165, %6, %cst_45 {dimension_numbers = #tpu.dot_dimension_numbers<[1], [0], [0], [1], [0, 0, 1, 1], [], []>} : vector<8x128xf32>, vector<128x128xf32>, vector<8x128xf32> -> vector<8x128xf32>
    %168 = arith.addf %166, %167 : vector<8x128xf32>
    %169 = arith.negf %168 : vector<8x128xf32>
    %170 = math.exp %169 : vector<8x128xf32>
    %cst_46 = arith.constant 1.000000e+00 : f32
    %171 = vector.broadcast %cst_46 : f32 to vector<8x128xf32>
    %172 = arith.addf %171, %170 : vector<8x128xf32>
    %173 = arith.divf %171, %172 : vector<8x128xf32>
    %c32_i32_47 = arith.constant 32 : i32
    %174 = tpu.dynamic_rotate %173 by %c32_i32_47 dim 1 : vector<8x128xf32>, i32 -> vector<8x128xf32>
    %175 = arith.addf %167, %9 : vector<8x128xf32>
    %176 = arith.mulf %174, %175 : vector<8x128xf32>
    %177 = arith.addf %166, %176 : vector<8x128xf32>
    %178 = math.tanh %177 : vector<8x128xf32>
    %c64_i32_48 = arith.constant 64 : i32
    %179 = tpu.dynamic_rotate %178 by %c64_i32_48 dim 1 : vector<8x128xf32>, i32 -> vector<8x128xf32>
    %cst_49 = arith.constant 1.000000e+00 : f32
    %180 = vector.broadcast %cst_49 : f32 to vector<8x128xf32>
    %181 = arith.subf %180, %173 : vector<8x128xf32>
    %182 = arith.mulf %181, %179 : vector<8x128xf32>
    %183 = arith.mulf %173, %165 : vector<8x128xf32>
    %184 = arith.addf %182, %183 : vector<8x128xf32>
    %c7_i32 = arith.constant 7 : i32
    %185 = vector.broadcast %c7_i32 : i32 to vector<8x128xi32>
    %186 = arith.cmpi sgt, %10, %185 : vector<8x128xi32>
    %187 = arith.select %186, %184, %165 : vector<8x128xi1>, vector<8x128xf32>
    %c0_50 = arith.constant 0 : index
    %c0_51 = arith.constant 0 : index
    %188 = vector.load %arg7[%c0_50, %c0_51] : memref<128x128xf32, #tpu.memory_space<vmem>>, vector<128x128xf32>
    %cst_52 = arith.constant dense<0.000000e+00> : vector<8x128xf32>
    %189 = tpu.matmul %187, %188, %cst_52 {dimension_numbers = #tpu.dot_dimension_numbers<[1], [0], [0], [1], [0, 0, 1, 1], [], []>} : vector<8x128xf32>, vector<128x128xf32>, vector<8x128xf32> -> vector<8x128xf32>
    %c0_53 = arith.constant 0 : index
    %c0_54 = arith.constant 0 : index
    %190 = vector.load %arg8[%c0_53, %c0_54] : memref<1x128xf32, #tpu.memory_space<vmem>>, vector<1x128xf32>
    %191 = vector.broadcast %190 : vector<1x128xf32> to vector<8x128xf32>
    %192 = arith.addf %189, %191 : vector<8x128xf32>
    %c0_55 = arith.constant 0 : index
    %c0_56 = arith.constant 0 : index
    %193 = vector.load %arg9[%c0_55, %c0_56] : memref<8x128xf32, #tpu.memory_space<vmem>>, vector<8x128xf32>
    tpu.vector_store %arg9[%c0_55, %c0_56], %192 {strides = array<i32>} : memref<8x128xf32, #tpu.memory_space<vmem>>, vector<8x128xf32>,
    return
  }
  func.func @transform_0(%arg0: i32) -> (i32, i32) {
    %c0_i32 = arith.constant 0 : i32
    %c0_i32_0 = arith.constant 0 : i32
    %c0_i32_1 = arith.constant 0 : i32
    return %c0_i32, %c0_i32_0 : i32, i32
  }
  func.func @transform_1(%arg0: i32) -> (i32, i32) {
    %c0_i32 = arith.constant 0 : i32
    %c0_i32_0 = arith.constant 0 : i32
    %c0_i32_1 = arith.constant 0 : i32
    return %c0_i32, %c0_i32_0 : i32, i32
  }
  func.func @transform_2(%arg0: i32) -> (i32, i32) {
    %c0_i32 = arith.constant 0 : i32
    %c0_i32_0 = arith.constant 0 : i32
    %c0_i32_1 = arith.constant 0 : i32
    return %c0_i32, %c0_i32_0 : i32, i32
  }
  func.func @transform_3(%arg0: i32) -> (i32, i32) {
    %c0_i32 = arith.constant 0 : i32
    %c0_i32_0 = arith.constant 0 : i32
    %c0_i32_1 = arith.constant 0 : i32
    return %c0_i32, %c0_i32_0 : i32, i32
  }
  func.func @transform_4(%arg0: i32) -> (i32, i32) {
    %c0_i32 = arith.constant 0 : i32
    %c0_i32_0 = arith.constant 0 : i32
    %c0_i32_1 = arith.constant 0 : i32
    return %c0_i32, %c0_i32_0 : i32, i32
  }
  func.func @transform_5(%arg0: i32) -> (i32, i32) {
    %c0_i32 = arith.constant 0 : i32
    %c0_i32_0 = arith.constant 0 : i32
    %c0_i32_1 = arith.constant 0 : i32
    return %c0_i32, %c0_i32_0 : i32, i32
  }
  func.func @transform_6(%arg0: i32) -> (i32, i32) {
    %c0_i32 = arith.constant 0 : i32
    %c0_i32_0 = arith.constant 0 : i32
    %c0_i32_1 = arith.constant 0 : i32
    return %c0_i32, %c0_i32_0 : i32, i32
  }
  func.func @transform_7(%arg0: i32) -> (i32, i32) {
    %c0_i32 = arith.constant 0 : i32
    %c0_i32_0 = arith.constant 0 : i32
    %c0_i32_1 = arith.constant 0 : i32
    return %c0_i32, %c0_i32_0 : i32, i32
  }
  func.func @transform_8(%arg0: i32) -> (i32, i32) {
    %c0_i32 = arith.constant 0 : i32
    %c0_i32_0 = arith.constant 0 : i32
    %c0_i32_1 = arith.constant 0 : i32
    return %c0_i32, %c0_i32_0 : i32, i32
  }
}

</mosaic_0001>

<llo_original>
// kernel: single_text_model_forward.1
$region0: #{single_text_model_forward.1}
  #allocation0 [shape = 'u32[]', space=smem, size = 0x4, offset = 0x4, fixed_abs, tag = 'smem constant byte address 0x4 - core index']
  #allocation1 [shape = 'u32[144,128]{1,0:T(1,128)}', space=vmem, size = 0x12000, scoped, tag = 'internal scratch']
  %s0 = inlined_call_operand.vmem [shape: f32[64,128], index: 0, kind: input, shape index: {}]
  %s1 = inlined_call_operand.vmem [shape: s32[8,128], index: 1, kind: input, shape index: {}]
  %s2 = inlined_call_operand.vmem [shape: f32[128,128], index: 2, kind: input, shape index: {}]
  %s3 = inlined_call_operand.vmem [shape: f32[1,128], index: 3, kind: input, shape index: {}]
  %s4 = inlined_call_operand.vmem [shape: f32[128,128], index: 4, kind: input, shape index: {}]
  %s5 = inlined_call_operand.vmem [shape: f32[1,128], index: 5, kind: input, shape index: {}]
  %s6 = inlined_call_operand.vmem [shape: f32[128,128], index: 6, kind: input, shape index: {}]
  %s7 = inlined_call_operand.vmem [shape: f32[1,128], index: 7, kind: input, shape index: {}]
  %s8 = inlined_call_operand.vmem [shape: f32[8,128], index: 8, kind: output, shape index: {}]
  %s9 = sld [smem:[#allocation0]]
  $region42: #{single_text_model_forward.1} parent=0
    _
  %s11 = ssub.s32 1, %s9
  %s12 = scalar_select 0, %s11, %s9
  // Predicated region
  $region2: #{single_text_model_forward.1} parent=0 // pred_check
    _
  $region3: #{single_text_model_forward.1} parent=0 // pred_check_branch
    %14 = sbr.rel (0) target = $region5
  $region4: #{single_text_model_forward.1} parent=0 // pred_region
    _
  $region5: #{single_text_model_forward.1} parent=0 // pred_fallthru
    _
  // Predicated region
  $region6: #{single_text_model_forward.1} parent=0 // pred_check
    _
  $region7: #{single_text_model_forward.1} parent=0 // pred_check_branch
    %16 = sbr.rel (0) target = $region9
  $region8: #{single_text_model_forward.1} parent=0 // pred_region
    _
  $region9: #{single_text_model_forward.1} parent=0 // pred_fallthru
    _
  // Predicated region
  $region10: #{single_text_model_forward.1} parent=0 // pred_check
    _
  $region11: #{single_text_model_forward.1} parent=0 // pred_check_branch
    %18 = sbr.rel (0) target = $region13
  $region12: #{single_text_model_forward.1} parent=0 // pred_region
    _
  $region13: #{single_text_model_forward.1} parent=0 // pred_fallthru
    _
  // Predicated region
  $region14: #{single_text_model_forward.1} parent=0 // pred_check
    _
  $region15: #{single_text_model_forward.1} parent=0 // pred_check_branch
    %20 = sbr.rel (0) target = $region17
  $region16: #{single_text_model_forward.1} parent=0 // pred_region
    _
  $region17: #{single_text_model_forward.1} parent=0 // pred_fallthru
    _
  // Predicated region
  $region18: #{single_text_model_forward.1} parent=0 // pred_check
    _
  $region19: #{single_text_model_forward.1} parent=0 // pred_check_branch
    %22 = sbr.rel (0) target = $region21
  $region20: #{single_text_model_forward.1} parent=0 // pred_region
    _
  $region21: #{single_text_model_forward.1} parent=0 // pred_fallthru
    _
  // Predicated region
  $region22: #{single_text_model_forward.1} parent=0 // pred_check
    _
  $region23: #{single_text_model_forward.1} parent=0 // pred_check_branch
    %24 = sbr.rel (0) target = $region25
  $region24: #{single_text_model_forward.1} parent=0 // pred_region
    _
  $region25: #{single_text_model_forward.1} parent=0 // pred_fallthru
    _
  // Predicated region
  $region26: #{single_text_model_forward.1} parent=0 // pred_check
    _
  $region27: #{single_text_model_forward.1} parent=0 // pred_check_branch
    %26 = sbr.rel (0) target = $region29
  $region28: #{single_text_model_forward.1} parent=0 // pred_region
    _
  $region29: #{single_text_model_forward.1} parent=0 // pred_fallthru
    _
  // Predicated region
  $region30: #{single_text_model_forward.1} parent=0 // pred_check
    _
  $region31: #{single_text_model_forward.1} parent=0 // pred_check_branch
    %28 = sbr.rel (0) target = $region33
  $region32: #{single_text_model_forward.1} parent=0 // pred_region
    _
  $region33: #{single_text_model_forward.1} parent=0 // pred_fallthru
    _
  %v29 = vld [vmem:[%s0] sm:$0xff]
  %v30 = vld [vmem:[%s0 + $0x8] sm:$0xff]
  %v31 = vld [vmem:[%s0 + $0x10] sm:$0xff]
  %v32 = vld [vmem:[%s0 + $0x18] sm:$0xff]
  %v33 = vld [vmem:[%s0 + $0x20] sm:$0xff]
  %v34 = vld [vmem:[%s0 + $0x28] sm:$0xff]
  %v35 = vld [vmem:[%s0 + $0x30] sm:$0xff]
  %v36 = vld [vmem:[%s0 + $0x38] sm:$0xff]
  %v37 = vld [vmem:[%s2] sm:$0xff]
  %v38 = vld [vmem:[%s2 + $0x8] sm:$0xff]
  %v39 = vld [vmem:[%s2 + $0x10] sm:$0xff]
  %v40 = vld [vmem:[%s2 + $0x18] sm:$0xff]
  %v41 = vld [vmem:[%s2 + $0x20] sm:$0xff]
  %v42 = vld [vmem:[%s2 + $0x28] sm:$0xff]
  %v43 = vld [vmem:[%s2 + $0x30] sm:$0xff]
  %v44 = vld [vmem:[%s2 + $0x38] sm:$0xff]
  %v45 = vld [vmem:[%s2 + $0x40] sm:$0xff]
  %v46 = vld [vmem:[%s2 + $0x48] sm:$0xff]
  %v47 = vld [vmem:[%s2 + $0x50] sm:$0xff]
  %v48 = vld [vmem:[%s2 + $0x58] sm:$0xff]
  %v49 = vld [vmem:[%s2 + $0x60] sm:$0xff]
  %v50 = vld [vmem:[%s2 + $0x68] sm:$0xff]
  %v51 = vld [vmem:[%s2 + $0x70] sm:$0xff]
  %v52 = vld [vmem:[%s2 + $0x78] sm:$0xff]
  %v53 = vld [vmem:[%s3] sm:$0x1]
  %v55 = vlaneseq
  %v56 = vshrl.u32 %v55, 7
  %v57 = vsub.s32 0, %v56
  %v58 = vrot.slane %v53, %v57
  %60 = vmatprep.subr.mxu0 0.0
  %61 = vmatpush1.msra.mxu0 %v52
  %62 = vmatprep.subr.mxu0 0.0
  %63 = vmatpush1.msra.mxu0 %v51
  %64 = vmatprep.subr.mxu0 0.0
  %65 = vmatpush1.msra.mxu0 %v50
  %66 = vmatprep.subr.mxu0 0.0
  %67 = vmatpush1.msra.mxu0 %v49
  %68 = vmatprep.subr.mxu0 0.0
  %69 = vmatpush1.msra.mxu0 %v48
  %70 = vmatprep.subr.mxu0 0.0
  %71 = vmatpush1.msra.mxu0 %v47
  %72 = vmatprep.subr.mxu0 0.0
  %73 = vmatpush1.msra.mxu0 %v46
  %74 = vmatprep.subr.mxu0 0.0
  %75 = vmatpush1.msra.mxu0 %v45
  %76 = vmatprep.subr.mxu0 0.0
  %77 = vmatpush1.msra.mxu0 %v44
  %78 = vmatprep.subr.mxu0 0.0
  %79 = vmatpush1.msra.mxu0 %v43
  %80 = vmatprep.subr.mxu0 0.0
  %81 = vmatpush1.msra.mxu0 %v42
  %82 = vmatprep.subr.mxu0 0.0
  %83 = vmatpush1.msra.mxu0 %v41
  %84 = vmatprep.subr.mxu0 0.0
  %85 = vmatpush1.msra.mxu0 %v40
  %86 = vmatprep.subr.mxu0 0.0
  %87 = vmatpush1.msra.mxu0 %v39
  %88 = vmatprep.subr.mxu0 0.0
  %89 = vmatpush1.msra.mxu0 %v38
  %90 = vmatprep.subr.mxu0 0.0
  %91 = vmatpush1.msra.mxu0 %v37
  %92 = vmatprep.subr.mxu0 0.0
  %93 = vmatpush2.msra.mxu0 0.0
  %94 = vmatprep.subr.mxu0 0.0
  %95 = vmatpush2.msra.mxu0 0.0
  %96 = vmatprep.subr.mxu0 0.0
  %97 = vmatpush2.msra.mxu0 0.0
  %98 = vmatprep.subr.mxu0 0.0
  %99 = vmatpush2.msra.mxu0 0.0
  %100 = vmatprep.subr.mxu0 0.0
  %101 = vmatpush2.msra.mxu0 0.0
  %102 = vmatprep.subr.mxu0 0.0
  %103 = vmatpush2.msra.mxu0 0.0
  %104 = vmatprep.subr.mxu0 0.0
  %105 = vmatpush2.msra.mxu0 0.0
  %106 = vmatprep.subr.mxu0 0.0
  %107 = vmatpush2.msra.mxu0 0.0
  %108 = vmatprep.subr.mxu0 0.0
  %109 = vmatpush2.msra.mxu0 0.0
  %110 = vmatprep.subr.mxu0 0.0
  %111 = vmatpush2.msra.mxu0 0.0
  %112 = vmatprep.subr.mxu0 0.0
  %113 = vmatpush2.msra.mxu0 0.0
  %114 = vmatprep.subr.mxu0 0.0
  %115 = vmatpush2.msra.mxu0 0.0
  %116 = vmatprep.subr.mxu0 0.0
  %117 = vmatpush2.msra.mxu0 0.0
  %118 = vmatprep.subr.mxu0 0.0
  %119 = vmatpush2.msra.mxu0 0.0
  %120 = vmatprep.subr.mxu0 0.0
  %121 = vmatpush2.msra.mxu0 0.0
  %122 = vmatprep.subr.mxu0 0.0
  %123 = vmatpush2.msra.mxu0 0.0
  %124 = vmatprep.mubr.f32.mxu0 0.0
  %125 = vmatmul.mubr.f32.gmra.mxu0 %v29
  %v126 = vpop.f32.mrf.mxu0
  %v127 = vadd.f32 %v58, %v126
  %v128 = vpop.f32.mrf.mxu0
  %129 = vmatprep.mubr.f32.mxu0 0.0
  %130 = vmatmul.mubr.f32.gmra.mxu0 %v30
  %v131 = vpop.f32.mrf.mxu0
  %v132 = vadd.f32 %v58, %v131
  %v133 = vpop.f32.mrf.mxu0
  %134 = vmatprep.mubr.f32.mxu0 0.0
  %135 = vmatmul.mubr.f32.gmra.mxu0 %v31
  %v136 = vpop.f32.mrf.mxu0
  %v137 = vadd.f32 %v58, %v136
  %v138 = vpop.f32.mrf.mxu0
  %139 = vmatprep.mubr.f32.mxu0 0.0
  %140 = vmatmul.mubr.f32.gmra.mxu0 %v32
  %v141 = vpop.f32.mrf.mxu0
  %v142 = vadd.f32 %v58, %v141
  %v143 = vpop.f32.mrf.mxu0
  %144 = vmatprep.mubr.f32.mxu0 0.0
  %145 = vmatmul.mubr.f32.gmra.mxu0 %v33
  %v146 = vpop.f32.mrf.mxu0
  %v147 = vadd.f32 %v58, %v146
  %v148 = vpop.f32.mrf.mxu0
  %149 = vmatprep.mubr.f32.mxu0 0.0
  %150 = vmatmul.mubr.f32.gmra.mxu0 %v34
  %v151 = vpop.f32.mrf.mxu0
  %v152 = vadd.f32 %v58, %v151
  %v153 = vpop.f32.mrf.mxu0
  %154 = vmatprep.mubr.f32.mxu0 0.0
  %155 = vmatmul.mubr.f32.gmra.mxu0 %v35
  %v156 = vpop.f32.mrf.mxu0
  %v157 = vadd.f32 %v58, %v156
  %v158 = vpop.f32.mrf.mxu0
  %159 = vmatprep.mubr.f32.mxu0 0.0
  %160 = vmatmul.mubr.f32.gmra.mxu0 %v36
  %v161 = vpop.f32.mrf.mxu0
  %v162 = vadd.f32 %v58, %v161
  %v163 = vpop.f32.mrf.mxu0
  %164 = vdwg.mxu0
  %v165 = vld [vmem:[%s4] sm:$0xff]
  %v166 = vld [vmem:[%s4 + $0x8] sm:$0xff]
  %v167 = vld [vmem:[%s4 + $0x10] sm:$0xff]
  %v168 = vld [vmem:[%s4 + $0x18] sm:$0xff]
  %v169 = vld [vmem:[%s4 + $0x20] sm:$0xff]
  %v170 = vld [vmem:[%s4 + $0x28] sm:$0xff]
  %v171 = vld [vmem:[%s4 + $0x30] sm:$0xff]
  %v172 = vld [vmem:[%s4 + $0x38] sm:$0xff]
  %v173 = vld [vmem:[%s4 + $0x40] sm:$0xff]
  %v174 = vld [vmem:[%s4 + $0x48] sm:$0xff]
  %v175 = vld [vmem:[%s4 + $0x50] sm:$0xff]
  %v176 = vld [vmem:[%s4 + $0x58] sm:$0xff]
  %v177 = vld [vmem:[%s4 + $0x60] sm:$0xff]
  %v178 = vld [vmem:[%s4 + $0x68] sm:$0xff]
  %v179 = vld [vmem:[%s4 + $0x70] sm:$0xff]
  %v180 = vld [vmem:[%s4 + $0x78] sm:$0xff]
  %v181 = vld [vmem:[%s5] sm:$0x1]
  %v183 = vlaneseq
  %v184 = vshrl.u32 %v183, 7
  %v185 = vsub.s32 0, %v184
  %v186 = vrot.slane %v181, %v185
  %v188 = vld [vmem:[%s1] sm:$0xff]
  %189 = vmatprep.subr.mxu0 0.0
  %190 = vmatpush1.msra.mxu0 %v180
  %191 = vmatprep.subr.mxu0 0.0
  %192 = vmatpush1.msra.mxu0 %v179
  %193 = vmatprep.subr.mxu0 0.0
  %194 = vmatpush1.msra.mxu0 %v178
  %195 = vmatprep.subr.mxu0 0.0
  %196 = vmatpush1.msra.mxu0 %v177
  %197 = vmatprep.subr.mxu0 0.0
  %198 = vmatpush1.msra.mxu0 %v176
  %199 = vmatprep.subr.mxu0 0.0
  %200 = vmatpush1.msra.mxu0 %v175
  %201 = vmatprep.subr.mxu0 0.0
  %202 = vmatpush1.msra.mxu0 %v174
  %203 = vmatprep.subr.mxu0 0.0
  %204 = vmatpush1.msra.mxu0 %v173
  %205 = vmatprep.subr.mxu0 0.0
  %206 = vmatpush1.msra.mxu0 %v172
  %207 = vmatprep.subr.mxu0 0.0
  %208 = vmatpush1.msra.mxu0 %v171
  %209 = vmatprep.subr.mxu0 0.0
  %210 = vmatpush1.msra.mxu0 %v170
  %211 = vmatprep.subr.mxu0 0.0
  %212 = vmatpush1.msra.mxu0 %v169
  %213 = vmatprep.subr.mxu0 0.0
  %214 = vmatpush1.msra.mxu0 %v168
  %215 = vmatprep.subr.mxu0 0.0
  %216 = vmatpush1.msra.mxu0 %v167
  %217 = vmatprep.subr.mxu0 0.0
  %218 = vmatpush1.msra.mxu0 %v166
  %219 = vmatprep.subr.mxu0 0.0
  %220 = vmatpush1.msra.mxu0 %v165
  %221 = vmatprep.subr.mxu0 0.0
  %222 = vmatpush2.msra.mxu0 0.0
  %223 = vmatprep.subr.mxu0 0.0
  %224 = vmatpush2.msra.mxu0 0.0
  %225 = vmatprep.subr.mxu0 0.0
  %226 = vmatpush2.msra.mxu0 0.0
  %227 = vmatprep.subr.mxu0 0.0
  %228 = vmatpush2.msra.mxu0 0.0
  %229 = vmatprep.subr.mxu0 0.0
  %230 = vmatpush2.msra.mxu0 0.0
  %231 = vmatprep.subr.mxu0 0.0
  %232 = vmatpush2.msra.mxu0 0.0
  %233 = vmatprep.subr.mxu0 0.0
  %234 = vmatpush2.msra.mxu0 0.0
  %235 = vmatprep.subr.mxu0 0.0
  %236 = vmatpush2.msra.mxu0 0.0
  %237 = vmatprep.subr.mxu0 0.0
  %238 = vmatpush2.msra.mxu0 0.0
  %239 = vmatprep.subr.mxu0 0.0
  %240 = vmatpush2.msra.mxu0 0.0
  %241 = vmatprep.subr.mxu0 0.0
  %242 = vmatpush2.msra.mxu0 0.0
  %243 = vmatprep.subr.mxu0 0.0
  %244 = vmatpush2.msra.mxu0 0.0
  %245 = vmatprep.subr.mxu0 0.0
  %246 = vmatpush2.msra.mxu0 0.0
  %247 = vmatprep.subr.mxu0 0.0
  %248 = vmatpush2.msra.mxu0 0.0
  %249 = vmatprep.subr.mxu0 0.0
  %250 = vmatpush2.msra.mxu0 0.0
  %251 = vmatprep.subr.mxu0 0.0
  %252 = vmatpush2.msra.mxu0 0.0
  %253 = vmatprep.mubr.f32.mxu0 0.0
  %254 = vmatmul.mubr.f32.gmra.mxu0 0.0
  %v255 = vpop.f32.mrf.mxu0
  %v256 = vadd.f32 0.0, %v255
  %v257 = vpop.f32.mrf.mxu0
  %258 = vdwg.mxu0
  %v259 = vadd.f32 %v127, %v256
  %v260 = vxor.u32 %v259, 2147483648
  %v261 = vmul.f32 %v260, 1.442695
  %v262 = vpow.pop %v261
  %v263 = vadd.f32 %v262, 1.0
  %v264 = vrcp.pop %v263
  %v265 = vmul.f32 1.0, %v264
  %266 = vrot.lane.b32.xlu0 %v265, 32
  %v267 = vpop.permute.xlu0 %266
  %v268 = vadd.f32 %v256, %v186
  %v269 = vmul.f32 %v267, %v268
  %v270 = vadd.f32 %v127, %v269
  %v271 = vtanh.pop %v270
  %272 = vrot.lane.b32.xlu0 %v271, 64
  %v273 = vpop.permute.xlu0 %272
  %v274 = vsub.f32 1.0, %v265
  %v275 = vmul.f32 %v274, %v273
  %v276 = vmul.f32 %v265, 0.0
  %v277 = vadd.f32 %v275, %v276
  %vm278 = vcmp.gt.s32.totalorder %v188, 0
  %v279 = vsel %vm278, %v277, 0.0
  %280 = vmatprep.subr.mxu0 0.0
  %281 = vmatpush1.msra.mxu0 %v180
  %282 = vmatprep.subr.mxu0 0.0
  %283 = vmatpush1.msra.mxu0 %v179
  %284 = vmatprep.subr.mxu0 0.0
  %285 = vmatpush1.msra.mxu0 %v178
  %286 = vmatprep.subr.mxu0 0.0
  %287 = vmatpush1.msra.mxu0 %v177
  %288 = vmatprep.subr.mxu0 0.0
  %289 = vmatpush1.msra.mxu0 %v176
  %290 = vmatprep.subr.mxu0 0.0
  %291 = vmatpush1.msra.mxu0 %v175
  %292 = vmatprep.subr.mxu0 0.0
  %293 = vmatpush1.msra.mxu0 %v174
  %294 = vmatprep.subr.mxu0 0.0
  %295 = vmatpush1.msra.mxu0 %v173
  %296 = vmatprep.subr.mxu0 0.0
  %297 = vmatpush1.msra.mxu0 %v172
  %298 = vmatprep.subr.mxu0 0.0
  %299 = vmatpush1.msra.mxu0 %v171
  %300 = vmatprep.subr.mxu0 0.0
  %301 = vmatpush1.msra.mxu0 %v170
  %302 = vmatprep.subr.mxu0 0.0
  %303 = vmatpush1.msra.mxu0 %v169
  %304 = vmatprep.subr.mxu0 0.0
  %305 = vmatpush1.msra.mxu0 %v168
  %306 = vmatprep.subr.mxu0 0.0
  %307 = vmatpush1.msra.mxu0 %v167
  %308 = vmatprep.subr.mxu0 0.0
  %309 = vmatpush1.msra.mxu0 %v166
  %310 = vmatprep.subr.mxu0 0.0
  %311 = vmatpush1.msra.mxu0 %v165
  %312 = vmatprep.subr.mxu0 0.0
  %313 = vmatpush2.msra.mxu0 0.0
  %314 = vmatprep.subr.mxu0 0.0
  %315 = vmatpush2.msra.mxu0 0.0
  %316 = vmatprep.subr.mxu0 0.0
  %317 = vmatpush2.msra.mxu0 0.0
  %318 = vmatprep.subr.mxu0 0.0
  %319 = vmatpush2.msra.mxu0 0.0
  %320 = vmatprep.subr.mxu0 0.0
  %321 = vmatpush2.msra.mxu0 0.0
  %322 = vmatprep.subr.mxu0 0.0
  %323 = vmatpush2.msra.mxu0 0.0
  %324 = vmatprep.subr.mxu0 0.0
  %325 = vmatpush2.msra.mxu0 0.0
  %326 = vmatprep.subr.mxu0 0.0
  %327 = vmatpush2.msra.mxu0 0.0
  %328 = vmatprep.subr.mxu0 0.0
  %329 = vmatpush2.msra.mxu0 0.0
  %330 = vmatprep.subr.mxu0 0.0
  %331 = vmatpush2.msra.mxu0 0.0
  %332 = vmatprep.subr.mxu0 0.0
  %333 = vmatpush2.msra.mxu0 0.0
  %334 = vmatprep.subr.mxu0 0.0
  %335 = vmatpush2.msra.mxu0 0.0
  %336 = vmatprep.subr.mxu0 0.0
  %337 = vmatpush2.msra.mxu0 0.0
  %338 = vmatprep.subr.mxu0 0.0
  %339 = vmatpush2.msra.mxu0 0.0
  %340 = vmatprep.subr.mxu0 0.0
  %341 = vmatpush2.msra.mxu0 0.0
  %342 = vmatprep.subr.mxu0 0.0
  %343 = vmatpush2.msra.mxu0 0.0
  %344 = vmatprep.mubr.f32.mxu0 0.0
  %345 = vmatmul.mubr.f32.gmra.mxu0 %v279
  %v346 = vpop.f32.mrf.mxu0
  %v347 = vadd.f32 0.0, %v346
  %v348 = vpop.f32.mrf.mxu0
  %349 = vdwg.mxu0
  %v350 = vadd.f32 %v132, %v347
  %v351 = vxor.u32 %v350, 2147483648
  %v352 = vmul.f32 %v351, 1.442695
  %v353 = vpow.pop %v352
  %v354 = vadd.f32 %v353, 1.0
  %v355 = vrcp.pop %v354
  %v356 = vmul.f32 1.0, %v355
  %357 = vrot.lane.b32.xlu0 %v356, 32
  %v358 = vpop.permute.xlu0 %357
  %v359 = vadd.f32 %v347, %v186
  %v360 = vmul.f32 %v358, %v359
  %v361 = vadd.f32 %v132, %v360
  %v362 = vtanh.pop %v361
  %363 = vrot.lane.b32.xlu0 %v362, 64
  %v364 = vpop.permute.xlu0 %363
  %v365 = vsub.f32 1.0, %v356
  %v366 = vmul.f32 %v365, %v364
  %v367 = vmul.f32 %v356, %v279
  %v368 = vadd.f32 %v366, %v367
  %vm369 = vcmp.gt.s32.totalorder %v188, 1
  %v370 = vsel %vm369, %v368, %v279
  %371 = vmatprep.subr.mxu0 0.0
  %372 = vmatpush1.msra.mxu0 %v180
  %373 = vmatprep.subr.mxu0 0.0
  %374 = vmatpush1.msra.mxu0 %v179
  %375 = vmatprep.subr.mxu0 0.0
  %376 = vmatpush1.msra.mxu0 %v178
  %377 = vmatprep.subr.mxu0 0.0
  %378 = vmatpush1.msra.mxu0 %v177
  %379 = vmatprep.subr.mxu0 0.0
  %380 = vmatpush1.msra.mxu0 %v176
  %381 = vmatprep.subr.mxu0 0.0
  %382 = vmatpush1.msra.mxu0 %v175
  %383 = vmatprep.subr.mxu0 0.0
  %384 = vmatpush1.msra.mxu0 %v174
  %385 = vmatprep.subr.mxu0 0.0
  %386 = vmatpush1.msra.mxu0 %v173
  %387 = vmatprep.subr.mxu0 0.0
  %388 = vmatpush1.msra.mxu0 %v172
  %389 = vmatprep.subr.mxu0 0.0
  %390 = vmatpush1.msra.mxu0 %v171
  %391 = vmatprep.subr.mxu0 0.0
  %392 = vmatpush1.msra.mxu0 %v170
  %393 = vmatprep.subr.mxu0 0.0
  %394 = vmatpush1.msra.mxu0 %v169
  %395 = vmatprep.subr.mxu0 0.0
  %396 = vmatpush1.msra.mxu0 %v168
  %397 = vmatprep.subr.mxu0 0.0
  %398 = vmatpush1.msra.mxu0 %v167
  %399 = vmatprep.subr.mxu0 0.0
  %400 = vmatpush1.msra.mxu0 %v166
  %401 = vmatprep.subr.mxu0 0.0
  %402 = vmatpush1.msra.mxu0 %v165
  %403 = vmatprep.subr.mxu0 0.0
  %404 = vmatpush2.msra.mxu0 0.0
  %405 = vmatprep.subr.mxu0 0.0
  %406 = vmatpush2.msra.mxu0 0.0
  %407 = vmatprep.subr.mxu0 0.0
  %408 = vmatpush2.msra.mxu0 0.0
  %409 = vmatprep.subr.mxu0 0.0
  %410 = vmatpush2.msra.mxu0 0.0
  %411 = vmatprep.subr.mxu0 0.0
  %412 = vmatpush2.msra.mxu0 0.0
  %413 = vmatprep.subr.mxu0 0.0
  %414 = vmatpush2.msra.mxu0 0.0
  %415 = vmatprep.subr.mxu0 0.0
  %416 = vmatpush2.msra.mxu0 0.0
  %417 = vmatprep.subr.mxu0 0.0
  %418 = vmatpush2.msra.mxu0 0.0
  %419 = vmatprep.subr.mxu0 0.0
  %420 = vmatpush2.msra.mxu0 0.0
  %421 = vmatprep.subr.mxu0 0.0
  %422 = vmatpush2.msra.mxu0 0.0
  %423 = vmatprep.subr.mxu0 0.0
  %424 = vmatpush2.msra.mxu0 0.0
  %425 = vmatprep.subr.mxu0 0.0
  %426 = vmatpush2.msra.mxu0 0.0
  %427 = vmatprep.subr.mxu0 0.0
  %428 = vmatpush2.msra.mxu0 0.0
  %429 = vmatprep.subr.mxu0 0.0
  %430 = vmatpush2.msra.mxu0 0.0
  %431 = vmatprep.subr.mxu0 0.0
  %432 = vmatpush2.msra.mxu0 0.0
  %433 = vmatprep.subr.mxu0 0.0
  %434 = vmatpush2.msra.mxu0 0.0
  %435 = vmatprep.mubr.f32.mxu0 0.0
  %436 = vmatmul.mubr.f32.gmra.mxu0 %v370
  %v437 = vpop.f32.mrf.mxu0
  %v438 = vadd.f32 0.0, %v437
  %v439 = vpop.f32.mrf.mxu0
  %440 = vdwg.mxu0
  %v441 = vadd.f32 %v137, %v438
  %v442 = vxor.u32 %v441, 2147483648
  %v443 = vmul.f32 %v442, 1.442695
  %v444 = vpow.pop %v443
  %v445 = vadd.f32 %v444, 1.0
  %v446 = vrcp.pop %v445
  %v447 = vmul.f32 1.0, %v446
  %448 = vrot.lane.b32.xlu0 %v447, 32
  %v449 = vpop.permute.xlu0 %448
  %v450 = vadd.f32 %v438, %v186
  %v451 = vmul.f32 %v449, %v450
  %v452 = vadd.f32 %v137, %v451
  %v453 = vtanh.pop %v452
  %454 = vrot.lane.b32.xlu0 %v453, 64
  %v455 = vpop.permute.xlu0 %454
  %v456 = vsub.f32 1.0, %v447
  %v457 = vmul.f32 %v456, %v455
  %v458 = vmul.f32 %v447, %v370
  %v459 = vadd.f32 %v457, %v458
  %vm460 = vcmp.gt.s32.totalorder %v188, 2
  %v461 = vsel %vm460, %v459, %v370
  %462 = vmatprep.subr.mxu0 0.0
  %463 = vmatpush1.msra.mxu0 %v180
  %464 = vmatprep.subr.mxu0 0.0
  %465 = vmatpush1.msra.mxu0 %v179
  %466 = vmatprep.subr.mxu0 0.0
  %467 = vmatpush1.msra.mxu0 %v178
  %468 = vmatprep.subr.mxu0 0.0
  %469 = vmatpush1.msra.mxu0 %v177
  %470 = vmatprep.subr.mxu0 0.0
  %471 = vmatpush1.msra.mxu0 %v176
  %472 = vmatprep.subr.mxu0 0.0
  %473 = vmatpush1.msra.mxu0 %v175
  %474 = vmatprep.subr.mxu0 0.0
  %475 = vmatpush1.msra.mxu0 %v174
  %476 = vmatprep.subr.mxu0 0.0
  %477 = vmatpush1.msra.mxu0 %v173
  %478 = vmatprep.subr.mxu0 0.0
  %479 = vmatpush1.msra.mxu0 %v172
  %480 = vmatprep.subr.mxu0 0.0
  %481 = vmatpush1.msra.mxu0 %v171
  %482 = vmatprep.subr.mxu0 0.0
  %483 = vmatpush1.msra.mxu0 %v170
  %484 = vmatprep.subr.mxu0 0.0
  %485 = vmatpush1.msra.mxu0 %v169
  %486 = vmatprep.subr.mxu0 0.0
  %487 = vmatpush1.msra.mxu0 %v168
  %488 = vmatprep.subr.mxu0 0.0
  %489 = vmatpush1.msra.mxu0 %v167
  %490 = vmatprep.subr.mxu0 0.0
  %491 = vmatpush1.msra.mxu0 %v166
  %492 = vmatprep.subr.mxu0 0.0
  %493 = vmatpush1.msra.mxu0 %v165
  %494 = vmatprep.subr.mxu0 0.0
  %495 = vmatpush2.msra.mxu0 0.0
  %496 = vmatprep.subr.mxu0 0.0
  %497 = vmatpush2.msra.mxu0 0.0
  %498 = vmatprep.subr.mxu0 0.0
  %499 = vmatpush2.msra.mxu0 0.0
  %500 = vmatprep.subr.mxu0 0.0
  %501 = vmatpush2.msra.mxu0 0.0
  %502 = vmatprep.subr.mxu0 0.0
  %503 = vmatpush2.msra.mxu0 0.0
  %504 = vmatprep.subr.mxu0 0.0
  %505 = vmatpush2.msra.mxu0 0.0
  %506 = vmatprep.subr.mxu0 0.0
  %507 = vmatpush2.msra.mxu0 0.0
  %508 = vmatprep.subr.mxu0 0.0
  %509 = vmatpush2.msra.mxu0 0.0
  %510 = vmatprep.subr.mxu0 0.0
  %511 = vmatpush2.msra.mxu0 0.0
  %512 = vmatprep.subr.mxu0 0.0
  %513 = vmatpush2.msra.mxu0 0.0
  %514 = vmatprep.subr.mxu0 0.0
  %515 = vmatpush2.msra.mxu0 0.0
  %516 = vmatprep.subr.mxu0 0.0
  %517 = vmatpush2.msra.mxu0 0.0
  %518 = vmatprep.subr.mxu0 0.0
  %519 = vmatpush2.msra.mxu0 0.0
  %520 = vmatprep.subr.mxu0 0.0
  %521 = vmatpush2.msra.mxu0 0.0
  %522 = vmatprep.subr.mxu0 0.0
  %523 = vmatpush2.msra.mxu0 0.0
  %524 = vmatprep.subr.mxu0 0.0
  %525 = vmatpush2.msra.mxu0 0.0
  %526 = vmatprep.mubr.f32.mxu0 0.0
  %527 = vmatmul.mubr.f32.gmra.mxu0 %v461
  %v528 = vpop.f32.mrf.mxu0
  %v529 = vadd.f32 0.0, %v528
  %v530 = vpop.f32.mrf.mxu0
  %531 = vdwg.mxu0
  %v532 = vadd.f32 %v142, %v529
  %v533 = vxor.u32 %v532, 2147483648
  %v534 = vmul.f32 %v533, 1.442695
  %v535 = vpow.pop %v534
  %v536 = vadd.f32 %v535, 1.0
  %v537 = vrcp.pop %v536
  %v538 = vmul.f32 1.0, %v537
  %539 = vrot.lane.b32.xlu0 %v538, 32
  %v540 = vpop.permute.xlu0 %539
  %v541 = vadd.f32 %v529, %v186
  %v542 = vmul.f32 %v540, %v541
  %v543 = vadd.f32 %v142, %v542
  %v544 = vtanh.pop %v543
  %545 = vrot.lane.b32.xlu0 %v544, 64
  %v546 = vpop.permute.xlu0 %545
  %v547 = vsub.f32 1.0, %v538
  %v548 = vmul.f32 %v547, %v546
  %v549 = vmul.f32 %v538, %v461
  %v550 = vadd.f32 %v548, %v549
  %vm551 = vcmp.gt.s32.totalorder %v188, 3
  %v552 = vsel %vm551, %v550, %v461
  %553 = vmatprep.subr.mxu0 0.0
  %554 = vmatpush1.msra.mxu0 %v180
  %555 = vmatprep.subr.mxu0 0.0
  %556 = vmatpush1.msra.mxu0 %v179
  %557 = vmatprep.subr.mxu0 0.0
  %558 = vmatpush1.msra.mxu0 %v178
  %559 = vmatprep.subr.mxu0 0.0
  %560 = vmatpush1.msra.mxu0 %v177
  %561 = vmatprep.subr.mxu0 0.0
  %562 = vmatpush1.msra.mxu0 %v176
  %563 = vmatprep.subr.mxu0 0.0
  %564 = vmatpush1.msra.mxu0 %v175
  %565 = vmatprep.subr.mxu0 0.0
  %566 = vmatpush1.msra.mxu0 %v174
  %567 = vmatprep.subr.mxu0 0.0
  %568 = vmatpush1.msra.mxu0 %v173
  %569 = vmatprep.subr.mxu0 0.0
  %570 = vmatpush1.msra.mxu0 %v172
  %571 = vmatprep.subr.mxu0 0.0
  %572 = vmatpush1.msra.mxu0 %v171
  %573 = vmatprep.subr.mxu0 0.0
  %574 = vmatpush1.msra.mxu0 %v170
  %575 = vmatprep.subr.mxu0 0.0
  %576 = vmatpush1.msra.mxu0 %v169
  %577 = vmatprep.subr.mxu0 0.0
  %578 = vmatpush1.msra.mxu0 %v168
  %579 = vmatprep.subr.mxu0 0.0
  %580 = vmatpush1.msra.mxu0 %v167
  %581 = vmatprep.subr.mxu0 0.0
  %582 = vmatpush1.msra.mxu0 %v166
  %583 = vmatprep.subr.mxu0 0.0
  %584 = vmatpush1.msra.mxu0 %v165
  %585 = vmatprep.subr.mxu0 0.0
  %586 = vmatpush2.msra.mxu0 0.0
  %587 = vmatprep.subr.mxu0 0.0
  %588 = vmatpush2.msra.mxu0 0.0
  %589 = vmatprep.subr.mxu0 0.0
  %590 = vmatpush2.msra.mxu0 0.0
  %591 = vmatprep.subr.mxu0 0.0
  %592 = vmatpush2.msra.mxu0 0.0
  %593 = vmatprep.subr.mxu0 0.0
  %594 = vmatpush2.msra.mxu0 0.0
  %595 = vmatprep.subr.mxu0 0.0
  %596 = vmatpush2.msra.mxu0 0.0
  %597 = vmatprep.subr.mxu0 0.0
  %598 = vmatpush2.msra.mxu0 0.0
  %599 = vmatprep.subr.mxu0 0.0
  %600 = vmatpush2.msra.mxu0 0.0
  %601 = vmatprep.subr.mxu0 0.0
  %602 = vmatpush2.msra.mxu0 0.0
  %603 = vmatprep.subr.mxu0 0.0
  %604 = vmatpush2.msra.mxu0 0.0
  %605 = vmatprep.subr.mxu0 0.0
  %606 = vmatpush2.msra.mxu0 0.0
  %607 = vmatprep.subr.mxu0 0.0
  %608 = vmatpush2.msra.mxu0 0.0
  %609 = vmatprep.subr.mxu0 0.0
  %610 = vmatpush2.msra.mxu0 0.0
  %611 = vmatprep.subr.mxu0 0.0
  %612 = vmatpush2.msra.mxu0 0.0
  %613 = vmatprep.subr.mxu0 0.0
  %614 = vmatpush2.msra.mxu0 0.0
  %615 = vmatprep.subr.mxu0 0.0
  %616 = vmatpush2.msra.mxu0 0.0
  %617 = vmatprep.mubr.f32.mxu0 0.0
  %618 = vmatmul.mubr.f32.gmra.mxu0 %v552
  %v619 = vpop.f32.mrf.mxu0
  %v620 = vadd.f32 0.0, %v619
  %v621 = vpop.f32.mrf.mxu0
  %622 = vdwg.mxu0
  %v623 = vadd.f32 %v147, %v620
  %v624 = vxor.u32 %v623, 2147483648
  %v625 = vmul.f32 %v624, 1.442695
  %v626 = vpow.pop %v625
  %v627 = vadd.f32 %v626, 1.0
  %v628 = vrcp.pop %v627
  %v629 = vmul.f32 1.0, %v628
  %630 = vrot.lane.b32.xlu0 %v629, 32
  %v631 = vpop.permute.xlu0 %630
  %v632 = vadd.f32 %v620, %v186
  %v633 = vmul.f32 %v631, %v632
  %v634 = vadd.f32 %v147, %v633
  %v635 = vtanh.pop %v634
  %636 = vrot.lane.b32.xlu0 %v635, 64
  %v637 = vpop.permute.xlu0 %636
  %v638 = vsub.f32 1.0, %v629
  %v639 = vmul.f32 %v638, %v637
  %v640 = vmul.f32 %v629, %v552
  %v641 = vadd.f32 %v639, %v640
  %vm642 = vcmp.gt.s32.totalorder %v188, 4
  %v643 = vsel %vm642, %v641, %v552
  %644 = vmatprep.subr.mxu0 0.0
  %645 = vmatpush1.msra.mxu0 %v180
  %646 = vmatprep.subr.mxu0 0.0
  %647 = vmatpush1.msra.mxu0 %v179
  %648 = vmatprep.subr.mxu0 0.0
  %649 = vmatpush1.msra.mxu0 %v178
  %650 = vmatprep.subr.mxu0 0.0
  %651 = vmatpush1.msra.mxu0 %v177
  %652 = vmatprep.subr.mxu0 0.0
  %653 = vmatpush1.msra.mxu0 %v176
  %654 = vmatprep.subr.mxu0 0.0
  %655 = vmatpush1.msra.mxu0 %v175
  %656 = vmatprep.subr.mxu0 0.0
  %657 = vmatpush1.msra.mxu0 %v174
  %658 = vmatprep.subr.mxu0 0.0
  %659 = vmatpush1.msra.mxu0 %v173
  %660 = vmatprep.subr.mxu0 0.0
  %661 = vmatpush1.msra.mxu0 %v172
  %662 = vmatprep.subr.mxu0 0.0
  %663 = vmatpush1.msra.mxu0 %v171
  %664 = vmatprep.subr.mxu0 0.0
  %665 = vmatpush1.msra.mxu0 %v170
  %666 = vmatprep.subr.mxu0 0.0
  %667 = vmatpush1.msra.mxu0 %v169
  %668 = vmatprep.subr.mxu0 0.0
  %669 = vmatpush1.msra.mxu0 %v168
  %670 = vmatprep.subr.mxu0 0.0
  %671 = vmatpush1.msra.mxu0 %v167
  %672 = vmatprep.subr.mxu0 0.0
  %673 = vmatpush1.msra.mxu0 %v166
  %674 = vmatprep.subr.mxu0 0.0
  %675 = vmatpush1.msra.mxu0 %v165
  %676 = vmatprep.subr.mxu0 0.0
  %677 = vmatpush2.msra.mxu0 0.0
  %678 = vmatprep.subr.mxu0 0.0
  %679 = vmatpush2.msra.mxu0 0.0
  %680 = vmatprep.subr.mxu0 0.0
  %681 = vmatpush2.msra.mxu0 0.0
  %682 = vmatprep.subr.mxu0 0.0
  %683 = vmatpush2.msra.mxu0 0.0
  %684 = vmatprep.subr.mxu0 0.0
  %685 = vmatpush2.msra.mxu0 0.0
  %686 = vmatprep.subr.mxu0 0.0
  %687 = vmatpush2.msra.mxu0 0.0
  %688 = vmatprep.subr.mxu0 0.0
  %689 = vmatpush2.msra.mxu0 0.0
  %690 = vmatprep.subr.mxu0 0.0
  %691 = vmatpush2.msra.mxu0 0.0
  %692 = vmatprep.subr.mxu0 0.0
  %693 = vmatpush2.msra.mxu0 0.0
  %694 = vmatprep.subr.mxu0 0.0
  %695 = vmatpush2.msra.mxu0 0.0
  %696 = vmatprep.subr.mxu0 0.0
  %697 = vmatpush2.msra.mxu0 0.0
  %698 = vmatprep.subr.mxu0 0.0
  %699 = vmatpush2.msra.mxu0 0.0
  %700 = vmatprep.subr.mxu0 0.0
  %701 = vmatpush2.msra.mxu0 0.0
  %702 = vmatprep.subr.mxu0 0.0
  %703 = vmatpush2.msra.mxu0 0.0
  %704 = vmatprep.subr.mxu0 0.0
  %705 = vmatpush2.msra.mxu0 0.0
  %706 = vmatprep.subr.mxu0 0.0
  %707 = vmatpush2.msra.mxu0 0.0
  %708 = vmatprep.mubr.f32.mxu0 0.0
  %709 = vmatmul.mubr.f32.gmra.mxu0 %v643
  %v710 = vpop.f32.mrf.mxu0
  %v711 = vadd.f32 0.0, %v710
  %v712 = vpop.f32.mrf.mxu0
  %713 = vdwg.mxu0
  %v714 = vadd.f32 %v152, %v711
  %v715 = vxor.u32 %v714, 2147483648
  %v716 = vmul.f32 %v715, 1.442695
  %v717 = vpow.pop %v716
  %v718 = vadd.f32 %v717, 1.0
  %v719 = vrcp.pop %v718
  %v720 = vmul.f32 1.0, %v719
  %721 = vrot.lane.b32.xlu0 %v720, 32
  %v722 = vpop.permute.xlu0 %721
  %v723 = vadd.f32 %v711, %v186
  %v724 = vmul.f32 %v722, %v723
  %v725 = vadd.f32 %v152, %v724
  %v726 = vtanh.pop %v725
  %727 = vrot.lane.b32.xlu0 %v726, 64
  %v728 = vpop.permute.xlu0 %727
  %v729 = vsub.f32 1.0, %v720
  %v730 = vmul.f32 %v729, %v728
  %v731 = vmul.f32 %v720, %v643
  %v732 = vadd.f32 %v730, %v731
  %vm733 = vcmp.gt.s32.totalorder %v188, 5
  %v734 = vsel %vm733, %v732, %v643
  %735 = vmatprep.subr.mxu0 0.0
  %736 = vmatpush1.msra.mxu0 %v180
  %737 = vmatprep.subr.mxu0 0.0
  %738 = vmatpush1.msra.mxu0 %v179
  %739 = vmatprep.subr.mxu0 0.0
  %740 = vmatpush1.msra.mxu0 %v178
  %741 = vmatprep.subr.mxu0 0.0
  %742 = vmatpush1.msra.mxu0 %v177
  %743 = vmatprep.subr.mxu0 0.0
  %744 = vmatpush1.msra.mxu0 %v176
  %745 = vmatprep.subr.mxu0 0.0
  %746 = vmatpush1.msra.mxu0 %v175
  %747 = vmatprep.subr.mxu0 0.0
  %748 = vmatpush1.msra.mxu0 %v174
  %749 = vmatprep.subr.mxu0 0.0
  %750 = vmatpush1.msra.mxu0 %v173
  %751 = vmatprep.subr.mxu0 0.0
  %752 = vmatpush1.msra.mxu0 %v172
  %753 = vmatprep.subr.mxu0 0.0
  %754 = vmatpush1.msra.mxu0 %v171
  %755 = vmatprep.subr.mxu0 0.0
  %756 = vmatpush1.msra.mxu0 %v170
  %757 = vmatprep.subr.mxu0 0.0
  %758 = vmatpush1.msra.mxu0 %v169
  %759 = vmatprep.subr.mxu0 0.0
  %760 = vmatpush1.msra.mxu0 %v168
  %761 = vmatprep.subr.mxu0 0.0
  %762 = vmatpush1.msra.mxu0 %v167
  %763 = vmatprep.subr.mxu0 0.0
  %764 = vmatpush1.msra.mxu0 %v166
  %765 = vmatprep.subr.mxu0 0.0
  %766 = vmatpush1.msra.mxu0 %v165
  %767 = vmatprep.subr.mxu0 0.0
  %768 = vmatpush2.msra.mxu0 0.0
  %769 = vmatprep.subr.mxu0 0.0
  %770 = vmatpush2.msra.mxu0 0.0
  %771 = vmatprep.subr.mxu0 0.0
  %772 = vmatpush2.msra.mxu0 0.0
  %773 = vmatprep.subr.mxu0 0.0
  %774 = vmatpush2.msra.mxu0 0.0
  %775 = vmatprep.subr.mxu0 0.0
  %776 = vmatpush2.msra.mxu0 0.0
  %777 = vmatprep.subr.mxu0 0.0
  %778 = vmatpush2.msra.mxu0 0.0
  %779 = vmatprep.subr.mxu0 0.0
  %780 = vmatpush2.msra.mxu0 0.0
  %781 = vmatprep.subr.mxu0 0.0
  %782 = vmatpush2.msra.mxu0 0.0
  %783 = vmatprep.subr.mxu0 0.0
  %784 = vmatpush2.msra.mxu0 0.0
  %785 = vmatprep.subr.mxu0 0.0
  %786 = vmatpush2.msra.mxu0 0.0
  %787 = vmatprep.subr.mxu0 0.0
  %788 = vmatpush2.msra.mxu0 0.0
  %789 = vmatprep.subr.mxu0 0.0
  %790 = vmatpush2.msra.mxu0 0.0
  %791 = vmatprep.subr.mxu0 0.0
  %792 = vmatpush2.msra.mxu0 0.0
  %793 = vmatprep.subr.mxu0 0.0
  %794 = vmatpush2.msra.mxu0 0.0
  %795 = vmatprep.subr.mxu0 0.0
  %796 = vmatpush2.msra.mxu0 0.0
  %797 = vmatprep.subr.mxu0 0.0
  %798 = vmatpush2.msra.mxu0 0.0
  %799 = vmatprep.mubr.f32.mxu0 0.0
  %800 = vmatmul.mubr.f32.gmra.mxu0 %v734
  %v801 = vpop.f32.mrf.mxu0
  %v802 = vadd.f32 0.0, %v801
  %v803 = vpop.f32.mrf.mxu0
  %804 = vdwg.mxu0
  %v805 = vadd.f32 %v157, %v802
  %v806 = vxor.u32 %v805, 2147483648
  %v807 = vmul.f32 %v806, 1.442695
  %v808 = vpow.pop %v807
  %v809 = vadd.f32 %v808, 1.0
  %v810 = vrcp.pop %v809
  %v811 = vmul.f32 1.0, %v810
  %812 = vrot.lane.b32.xlu0 %v811, 32
  %v813 = vpop.permute.xlu0 %812
  %v814 = vadd.f32 %v802, %v186
  %v815 = vmul.f32 %v813, %v814
  %v816 = vadd.f32 %v157, %v815
  %v817 = vtanh.pop %v816
  %818 = vrot.lane.b32.xlu0 %v817, 64
  %v819 = vpop.permute.xlu0 %818
  %v820 = vsub.f32 1.0, %v811
  %v821 = vmul.f32 %v820, %v819
  %v822 = vmul.f32 %v811, %v734
  %v823 = vadd.f32 %v821, %v822
  %vm824 = vcmp.gt.s32.totalorder %v188, 6
  %v825 = vsel %vm824, %v823, %v734
  %826 = vmatprep.subr.mxu0 0.0
  %827 = vmatpush1.msra.mxu0 %v180
  %828 = vmatprep.subr.mxu0 0.0
  %829 = vmatpush1.msra.mxu0 %v179
  %830 = vmatprep.subr.mxu0 0.0
  %831 = vmatpush1.msra.mxu0 %v178
  %832 = vmatprep.subr.mxu0 0.0
  %833 = vmatpush1.msra.mxu0 %v177
  %834 = vmatprep.subr.mxu0 0.0
  %835 = vmatpush1.msra.mxu0 %v176
  %836 = vmatprep.subr.mxu0 0.0
  %837 = vmatpush1.msra.mxu0 %v175
  %838 = vmatprep.subr.mxu0 0.0
  %839 = vmatpush1.msra.mxu0 %v174
  %840 = vmatprep.subr.mxu0 0.0
  %841 = vmatpush1.msra.mxu0 %v173
  %842 = vmatprep.subr.mxu0 0.0
  %843 = vmatpush1.msra.mxu0 %v172
  %844 = vmatprep.subr.mxu0 0.0
  %845 = vmatpush1.msra.mxu0 %v171
  %846 = vmatprep.subr.mxu0 0.0
  %847 = vmatpush1.msra.mxu0 %v170
  %848 = vmatprep.subr.mxu0 0.0
  %849 = vmatpush1.msra.mxu0 %v169
  %850 = vmatprep.subr.mxu0 0.0
  %851 = vmatpush1.msra.mxu0 %v168
  %852 = vmatprep.subr.mxu0 0.0
  %853 = vmatpush1.msra.mxu0 %v167
  %854 = vmatprep.subr.mxu0 0.0
  %855 = vmatpush1.msra.mxu0 %v166
  %856 = vmatprep.subr.mxu0 0.0
  %857 = vmatpush1.msra.mxu0 %v165
  %858 = vmatprep.subr.mxu0 0.0
  %859 = vmatpush2.msra.mxu0 0.0
  %860 = vmatprep.subr.mxu0 0.0
  %861 = vmatpush2.msra.mxu0 0.0
  %862 = vmatprep.subr.mxu0 0.0
  %863 = vmatpush2.msra.mxu0 0.0
  %864 = vmatprep.subr.mxu0 0.0
  %865 = vmatpush2.msra.mxu0 0.0
  %866 = vmatprep.subr.mxu0 0.0
  %867 = vmatpush2.msra.mxu0 0.0
  %868 = vmatprep.subr.mxu0 0.0
  %869 = vmatpush2.msra.mxu0 0.0
  %870 = vmatprep.subr.mxu0 0.0
  %871 = vmatpush2.msra.mxu0 0.0
  %872 = vmatprep.subr.mxu0 0.0
  %873 = vmatpush2.msra.mxu0 0.0
  %874 = vmatprep.subr.mxu0 0.0
  %875 = vmatpush2.msra.mxu0 0.0
  %876 = vmatprep.subr.mxu0 0.0
  %877 = vmatpush2.msra.mxu0 0.0
  %878 = vmatprep.subr.mxu0 0.0
  %879 = vmatpush2.msra.mxu0 0.0
  %880 = vmatprep.subr.mxu0 0.0
  %881 = vmatpush2.msra.mxu0 0.0
  %882 = vmatprep.subr.mxu0 0.0
  %883 = vmatpush2.msra.mxu0 0.0
  %884 = vmatprep.subr.mxu0 0.0
  %885 = vmatpush2.msra.mxu0 0.0
  %886 = vmatprep.subr.mxu0 0.0
  %887 = vmatpush2.msra.mxu0 0.0
  %888 = vmatprep.subr.mxu0 0.0
  %889 = vmatpush2.msra.mxu0 0.0
  %890 = vmatprep.mubr.f32.mxu0 0.0
  %891 = vmatmul.mubr.f32.gmra.mxu0 %v825
  %v892 = vpop.f32.mrf.mxu0
  %v893 = vadd.f32 0.0, %v892
  %v894 = vpop.f32.mrf.mxu0
  %895 = vdwg.mxu0
  %v896 = vadd.f32 %v162, %v893
  %v897 = vxor.u32 %v896, 2147483648
  %v898 = vmul.f32 %v897, 1.442695
  %v899 = vpow.pop %v898
  %v900 = vadd.f32 %v899, 1.0
  %v901 = vrcp.pop %v900
  %v902 = vmul.f32 1.0, %v901
  %903 = vrot.lane.b32.xlu0 %v902, 32
  %v904 = vpop.permute.xlu0 %903
  %v905 = vadd.f32 %v893, %v186
  %v906 = vmul.f32 %v904, %v905
  %v907 = vadd.f32 %v162, %v906
  %v908 = vtanh.pop %v907
  %909 = vrot.lane.b32.xlu0 %v908, 64
  %v910 = vpop.permute.xlu0 %909
  %v911 = vsub.f32 1.0, %v902
  %v912 = vmul.f32 %v911, %v910
  %v913 = vmul.f32 %v902, %v825
  %v914 = vadd.f32 %v912, %v913
  %vm915 = vcmp.gt.s32.totalorder %v188, 7
  %v916 = vsel %vm915, %v914, %v825
  %v917 = vld [vmem:[%s6] sm:$0xff]
  %v918 = vld [vmem:[%s6 + $0x8] sm:$0xff]
  %v919 = vld [vmem:[%s6 + $0x10] sm:$0xff]
  %v920 = vld [vmem:[%s6 + $0x18] sm:$0xff]
  %v921 = vld [vmem:[%s6 + $0x20] sm:$0xff]
  %v922 = vld [vmem:[%s6 + $0x28] sm:$0xff]
  %v923 = vld [vmem:[%s6 + $0x30] sm:$0xff]
  %v924 = vld [vmem:[%s6 + $0x38] sm:$0xff]
  %v925 = vld [vmem:[%s6 + $0x40] sm:$0xff]
  %v926 = vld [vmem:[%s6 + $0x48] sm:$0xff]
  %v927 = vld [vmem:[%s6 + $0x50] sm:$0xff]
  %v928 = vld [vmem:[%s6 + $0x58] sm:$0xff]
  %v929 = vld [vmem:[%s6 + $0x60] sm:$0xff]
  %v930 = vld [vmem:[%s6 + $0x68] sm:$0xff]
  %v931 = vld [vmem:[%s6 + $0x70] sm:$0xff]
  %v932 = vld [vmem:[%s6 + $0x78] sm:$0xff]
  %v933 = vld [vmem:[%s7] sm:$0x1]
  %v935 = vlaneseq
  %v936 = vshrl.u32 %v935, 7
  %v937 = vsub.s32 0, %v936
  %v938 = vrot.slane %v933, %v937
  %940 = vmatprep.subr.mxu0 0.0
  %941 = vmatpush1.msra.mxu0 %v932
  %942 = vmatprep.subr.mxu0 0.0
  %943 = vmatpush1.msra.mxu0 %v931
  %944 = vmatprep.subr.mxu0 0.0
  %945 = vmatpush1.msra.mxu0 %v930
  %946 = vmatprep.subr.mxu0 0.0
  %947 = vmatpush1.msra.mxu0 %v929
  %948 = vmatprep.subr.mxu0 0.0
  %949 = vmatpush1.msra.mxu0 %v928
  %950 = vmatprep.subr.mxu0 0.0
  %951 = vmatpush1.msra.mxu0 %v927
  %952 = vmatprep.subr.mxu0 0.0
  %953 = vmatpush1.msra.mxu0 %v926
  %954 = vmatprep.subr.mxu0 0.0
  %955 = vmatpush1.msra.mxu0 %v925
  %956 = vmatprep.subr.mxu0 0.0
  %957 = vmatpush1.msra.mxu0 %v924
  %958 = vmatprep.subr.mxu0 0.0
  %959 = vmatpush1.msra.mxu0 %v923
  %960 = vmatprep.subr.mxu0 0.0
  %961 = vmatpush1.msra.mxu0 %v922
  %962 = vmatprep.subr.mxu0 0.0
  %963 = vmatpush1.msra.mxu0 %v921
  %964 = vmatprep.subr.mxu0 0.0
  %965 = vmatpush1.msra.mxu0 %v920
  %966 = vmatprep.subr.mxu0 0.0
  %967 = vmatpush1.msra.mxu0 %v919
  %968 = vmatprep.subr.mxu0 0.0
  %969 = vmatpush1.msra.mxu0 %v918
  %970 = vmatprep.subr.mxu0 0.0
  %971 = vmatpush1.msra.mxu0 %v917
  %972 = vmatprep.subr.mxu0 0.0
  %973 = vmatpush2.msra.mxu0 0.0
  %974 = vmatprep.subr.mxu0 0.0
  %975 = vmatpush2.msra.mxu0 0.0
  %976 = vmatprep.subr.mxu0 0.0
  %977 = vmatpush2.msra.mxu0 0.0
  %978 = vmatprep.subr.mxu0 0.0
  %979 = vmatpush2.msra.mxu0 0.0
  %980 = vmatprep.subr.mxu0 0.0
  %981 = vmatpush2.msra.mxu0 0.0
  %982 = vmatprep.subr.mxu0 0.0
  %983 = vmatpush2.msra.mxu0 0.0
  %984 = vmatprep.subr.mxu0 0.0
  %985 = vmatpush2.msra.mxu0 0.0
  %986 = vmatprep.subr.mxu0 0.0
  %987 = vmatpush2.msra.mxu0 0.0
  %988 = vmatprep.subr.mxu0 0.0
  %989 = vmatpush2.msra.mxu0 0.0
  %990 = vmatprep.subr.mxu0 0.0
  %991 = vmatpush2.msra.mxu0 0.0
  %992 = vmatprep.subr.mxu0 0.0
  %993 = vmatpush2.msra.mxu0 0.0
  %994 = vmatprep.subr.mxu0 0.0
  %995 = vmatpush2.msra.mxu0 0.0
  %996 = vmatprep.subr.mxu0 0.0
  %997 = vmatpush2.msra.mxu0 0.0
  %998 = vmatprep.subr.mxu0 0.0
  %999 = vmatpush2.msra.mxu0 0.0
  %1000 = vmatprep.subr.mxu0 0.0
  %1001 = vmatpush2.msra.mxu0 0.0
  %1002 = vmatprep.subr.mxu0 0.0
  %1003 = vmatpush2.msra.mxu0 0.0
  %1004 = vmatprep.mubr.f32.mxu0 0.0
  %1005 = vmatmul.mubr.f32.gmra.mxu0 %v916
  %v1006 = vpop.f32.mrf.mxu0
  %v1007 = vadd.f32 %v938, %v1006
  %v1008 = vpop.f32.mrf.mxu0
  %1009 = vdwg.mxu0
  %1010 = vst [vmem:[%s8] sm:$0xff] %v1007
  // Predicated region
  $region34: #{single_text_model_forward.1} parent=0 // pred_check
    _
  $region35: #{single_text_model_forward.1} parent=0 // pred_check_branch
    %1012 = sbr.rel (0) target = $region37
  $region36: #{single_text_model_forward.1} parent=0 // pred_region
    _
  $region37: #{single_text_model_forward.1} parent=0 // pred_fallthru
    _
  // Predicated region
  $region38: #{single_text_model_forward.1} parent=0 // pred_check
    _
  $region39: #{single_text_model_forward.1} parent=0 // pred_check_branch
    %1014 = sbr.rel (0) target = $region41
  $region40: #{single_text_model_forward.1} parent=0 // pred_region
    _
  $region41: #{single_text_model_forward.1} parent=0 // pred_fallthru
    _

</llo_original>
